<compile_context>
chip_gen: v7x
topology: tpu7x:2x2x1
jax: 0.10.0
libtpu: 0.0.40
codegen_flags: <defaults>
</compile_context>

<pallas_src>
import jax
import jax.numpy as jnp
from jax.experimental import pallas as pl
from jax.experimental.pallas import tpu as pltpu

ACTUAL_FEATURE_SIZE = 166   # hard-coded in the PyTorch module
NEG_BIG = -1e30             # bias for padded output-logit lanes (exp underflows to 0)


def _round_up(n, m):
    return (n + m - 1) // m * m


def _choose_tiling(B):
    """Bucketed batch padding + batch-tile selection.

    - Buckets b_pad to a small set of sizes (powers of two up to 2048, then
      multiples of 2048) so ragged rollout batches don't recompile per B.
    - Small batches (<=256 rows) run as a single grid step (latency path).
    - Larger batches get tiles of up to 1024 rows (amortizes per-step overhead)
      and always >=2 parallel grid steps so v7x's two TensorCores both get work.
    """
    if B <= 2048:
        b_pad = max(8, pl.next_power_of_2(B))
        tb = b_pad if b_pad <= 256 else b_pad // 2
    else:
        tb = 1024
        b_pad = _round_up(B, 2 * tb)   # even number of steps for 2-TC sharding
    return tb, b_pad


def _policy_kernel(g_ref, f_ref, wg_ref, wf_ref, w_stk_ref, b_stk_ref, out_ref):
    f32 = jnp.float32
    b = b_stk_ref[...]                                             # (8, 128) f32

    # Fused input layer: grid branch writes lanes 0:64, feature branch lanes
    # 64:128 (each padded weight has zeros in the other half), so the sum of the
    # two dots is exactly concat(grid_out, feature_out) + biases.  Lane-dense 128.
    h = (jnp.dot(g_ref[...], wg_ref[...], preferred_element_type=f32)
         + jnp.dot(f_ref[...], wf_ref[...], preferred_element_type=f32)
         + b[0:1, :])
    h = jnp.maximum(h, 0.0)                                        # (tb, 128)

    # combined_dense, hidden1, hidden2 — each zero-padded to (128, 128), stacked.
    for layer in range(3):
        h = jnp.dot(h.astype(w_stk_ref.dtype), w_stk_ref[layer],
                    preferred_element_type=f32) + b[layer + 1:layer + 2, :]
        h = jnp.maximum(h, 0.0)

    # Output head padded to 128 lanes; padded columns get a -1e30 bias.
    logits = jnp.dot(h.astype(w_stk_ref.dtype), w_stk_ref[3],
                     preferred_element_type=f32) + b[4:5, :]

    # Softmax over the full 128-lane vreg (padded lanes contribute exactly 0).
    m = jnp.max(logits, axis=-1, keepdims=True)
    e = jnp.exp(logits - m)
    s = jnp.sum(e, axis=-1, keepdims=True)
    # Exact VPU divide; approx=True (EUP vrcp) is free but ~1e-3 relative error.
    out_ref[...] = (e * pl.reciprocal(s, approx=False)).astype(out_ref.dtype)


def init_params(key, grid_size, feature_size, action_size):
    """Deterministic synthetic parameters, (in_features, out_features) layout."""
    dims = {
        "wg":  (grid_size * grid_size, 64),
        "wf":  (ACTUAL_FEATURE_SIZE, 64),
        "wc":  (128, 64),
        "wh1": (64, 64),
        "wh2": (64, 32),
        "wo":  (32, action_size),
    }
    params = {}
    keys = jax.random.split(key, len(dims))
    for (name, shape), k in zip(dims.items(), keys):
        fan_in = shape[0]
        params[name] = (jax.random.normal(k, shape, jnp.float32)
                        * (1.0 / jnp.sqrt(jnp.float32(fan_in))))
        params[name.replace("w", "b", 1)] = jnp.full((1, shape[1]), 0.01, jnp.float32)
    return params


def pack_params(params, grid_size, action_size, compute_dtype=jnp.float32):
    """One-time wrapper-side layout work: lane-padded branch weights, stacked
    128x128-padded layer weights and one packed f32 bias array.

    compute_dtype=jnp.bfloat16 streams weights/activations as bf16 (native MXU
    path on v6e/v7x, half the HBM bytes); accumulation/biases/softmax stay f32.
    """
    g2 = grid_size * grid_size

    # Grid-branch weight -> output lanes 0:64; feature-branch -> lanes 64:128.
    wg = jnp.zeros((g2, 128), jnp.float32).at[:, :64].set(params["wg"])
    wf = jnp.zeros((ACTUAL_FEATURE_SIZE, 128), jnp.float32).at[:, 64:128].set(params["wf"])

    w_stk = jnp.zeros((4, 128, 128), jnp.float32)
    w_stk = w_stk.at[0, :128, :64].set(params["wc"])            # combined_dense
    w_stk = w_stk.at[1, :64, :64].set(params["wh1"])            # hidden1
    w_stk = w_stk.at[2, :64, :32].set(params["wh2"])            # hidden2
    w_stk = w_stk.at[3, :32, :action_size].set(params["wo"])    # output head

    b_stk = jnp.zeros((8, 128), jnp.float32)
    b_stk = b_stk.at[0, :64].set(params["bg"][0])
    b_stk = b_stk.at[0, 64:128].set(params["bf"][0])
    b_stk = b_stk.at[1, :64].set(params["bc"][0])
    b_stk = b_stk.at[2, :64].set(params["bh1"][0])
    b_stk = b_stk.at[3, :32].set(params["bh2"][0])
    b_stk = b_stk.at[4, :].set(NEG_BIG)                         # padded logits -> -1e30
    b_stk = b_stk.at[4, :action_size].set(params["bo"][0])

    return {
        "wg": wg.astype(compute_dtype),
        "wf": wf.astype(compute_dtype),
        "w_stk": w_stk.astype(compute_dtype),
        "b_stk": b_stk,                                         # biases stay f32
        "g2": g2,
        "action_size": action_size,
        "compute_dtype": compute_dtype,
    }


def policy_network_forward(grid, features, packed):
    """grid: (B, G, G), features: (B, 166) -> (B, A) softmax probs."""
    B = grid.shape[0]
    g2 = packed["g2"]
    action_size = packed["action_size"]
    cdt = packed["compute_dtype"]

    grid_flat = grid.reshape(B, g2).astype(cdt)       # nn.Flatten(); reshape is a view
    feats = features.astype(cdt)

    tb, b_pad = _choose_tiling(B)
    if b_pad != B:
        # Row padding only (to a bucketed size); no fused/column-padded input is
        # materialized, so there is no extra full-batch HBM pass in the wrapper.
        grid_flat = jnp.pad(grid_flat, ((0, b_pad - B), (0, 0)))
        feats = jnp.pad(feats, ((0, b_pad - B), (0, 0)))

    out = pl.pallas_call(
        _policy_kernel,
        out_shape=jax.ShapeDtypeStruct((b_pad, 128), cdt),
        grid=(b_pad // tb,),
        in_specs=[
            pl.BlockSpec((tb, g2), lambda i: (i, 0)),
            pl.BlockSpec((tb, ACTUAL_FEATURE_SIZE), lambda i: (i, 0)),
            # Grid-invariant weight/bias blocks (same block index every step —
            # Pallas does not re-DMA them across grid iterations).
            pl.BlockSpec((g2, 128), lambda i: (0, 0)),
            pl.BlockSpec((ACTUAL_FEATURE_SIZE, 128), lambda i: (0, 0)),
            pl.BlockSpec((4, 128, 128), lambda i: (0, 0, 0)),
            pl.BlockSpec((8, 128), lambda i: (0, 0)),
        ],
        out_specs=pl.BlockSpec((tb, 128), lambda i: (i, 0)),
        compiler_params=pltpu.CompilerParams(dimension_semantics=("parallel",)),
        # NOTE: at tb<=1024 total VMEM (incl. double buffers) is only a few MiB;
        # if tb is ever pushed past ~2048, add vmem_limit_bytes for v5e (16 MiB
        # default scoped limit).
    )(grid_flat, feats, packed["wg"], packed["wf"], packed["w_stk"], packed["b_stk"])

    return out[:B, :action_size]


def _reference_forward(grid, features, params):
    """Pure-JAX reference matching the PyTorch module (for correctness checking)."""
    B = grid.shape[0]
    x = grid.reshape(B, -1)
    g = jax.nn.relu(x @ params["wg"] + params["bg"])
    f = jax.nn.relu(features @ params["wf"] + params["bf"])
    c = jax.nn.relu(jnp.concatenate([g, f], axis=-1) @ params["wc"] + params["bc"])
    h1 = jax.nn.relu(c @ params["wh1"] + params["bh1"])
    h2 = jax.nn.relu(h1 @ params["wh2"] + params["bh2"])
    logits = h2 @ params["wo"] + params["bo"]
    return jax.nn.softmax(logits, axis=-1)


if __name__ == "__main__":
    GRID_SIZE = 8          # grid flattens to 64 features
    FEATURE_SIZE = 166     # module hard-codes actual_feature_size = 166
    ACTION_SIZE = 4
    BATCH = 8

    key = jax.random.PRNGKey(0)
    k_grid, k_feat, k_params = jax.random.split(key, 3)

    grid = jax.random.normal(k_grid, (BATCH, GRID_SIZE, GRID_SIZE), jnp.float32)
    features = jax.random.normal(k_feat, (BATCH, FEATURE_SIZE), jnp.float32)
    params = init_params(k_params, GRID_SIZE, FEATURE_SIZE, ACTION_SIZE)
    ref = _reference_forward(grid, features, params)

    # Exact f32 path: matches the PyTorch-equivalent reference to 1e-5.
    packed_f32 = pack_params(params, GRID_SIZE, ACTION_SIZE, compute_dtype=jnp.float32)
    out = jax.block_until_ready(policy_network_forward(grid, features, packed_f32))
    assert out.shape == (BATCH, ACTION_SIZE)
    assert jnp.allclose(out, ref, atol=1e-5, rtol=1e-5), "f32 mismatch vs reference"
    assert jnp.allclose(jnp.sum(out, axis=-1), 1.0, atol=1e-5), "softmax rows must sum to 1"

    # bf16 operand path (v6e/v7x native MXU, half the HBM traffic); f32 accumulation
    # inside the kernel, so only a loose tolerance vs. the f32 reference is expected.
    packed_bf16 = pack_params(params, GRID_SIZE, ACTION_SIZE, compute_dtype=jnp.bfloat16)
    out_bf16 = jax.block_until_ready(policy_network_forward(grid, features, packed_bf16))
    assert out_bf16.shape == (BATCH, ACTION_SIZE)
    assert jnp.allclose(out_bf16.astype(jnp.float32), ref, atol=5e-2, rtol=5e-2), \
        "bf16 mismatch vs reference"

    print("KERNEL_OK")
</pallas_src>

<mosaic_0001>
module attributes {stable_mosaic.version = 11 : i64} {
  func.func @_policy_kernel(%arg0: i32, %arg1: memref<8x64xf32, #tpu.memory_space<vmem>>, %arg2: memref<8x166xf32, #tpu.memory_space<vmem>>, %arg3: memref<64x128xf32, #tpu.memory_space<vmem>>, %arg4: memref<166x128xf32, #tpu.memory_space<vmem>>, %arg5: memref<4x128x128xf32, #tpu.memory_space<vmem>>, %arg6: memref<8x128xf32, #tpu.memory_space<vmem>>, %arg7: memref<8x128xf32, #tpu.memory_space<vmem>>) attributes {dimension_semantics = [#tpu.dimension_semantics<parallel>], iteration_bounds = array<i64: 1>, scalar_prefetch = 0 : i64, scratch_operands = 0 : i64, tpu.core_type = #tpu.core_type<tc>, window_params = [{transform_indices = @transform_0, window_bounds = array<i64: 8, 64>}, {transform_indices = @transform_1, window_bounds = array<i64: 8, 166>}, {pipeline_mode = #tpu.pipeline_mode<synchronous>, transform_indices = @transform_2, window_bounds = array<i64: 64, 128>}, {pipeline_mode = #tpu.pipeline_mode<synchronous>, transform_indices = @transform_3, window_bounds = array<i64: 166, 128>}, {pipeline_mode = #tpu.pipeline_mode<synchronous>, transform_indices = @transform_4, window_bounds = array<i64: 4, 128, 128>}, {pipeline_mode = #tpu.pipeline_mode<synchronous>, transform_indices = @transform_5, window_bounds = array<i64: 8, 128>}, {transform_indices = @transform_6, window_bounds = array<i64: 8, 128>}]} {
    %c0 = arith.constant 0 : index
    %c0_0 = arith.constant 0 : index
    %0 = vector.load %arg6[%c0, %c0_0] : memref<8x128xf32, #tpu.memory_space<vmem>>, vector<8x128xf32>
    %c0_1 = arith.constant 0 : index
    %c0_2 = arith.constant 0 : index
    %1 = vector.load %arg1[%c0_1, %c0_2] : memref<8x64xf32, #tpu.memory_space<vmem>>, vector<8x64xf32>
    %c0_3 = arith.constant 0 : index
    %c0_4 = arith.constant 0 : index
    %2 = vector.load %arg3[%c0_3, %c0_4] : memref<64x128xf32, #tpu.memory_space<vmem>>, vector<64x128xf32>
    %cst = arith.constant dense<0.000000e+00> : vector<8x128xf32>
    %3 = tpu.matmul %1, %2, %cst {dimension_numbers = #tpu.dot_dimension_numbers<[1], [0], [0], [1], [0, 0, 1, 1], [], []>} : vector<8x64xf32>, vector<64x128xf32>, vector<8x128xf32> -> vector<8x128xf32>
    %c0_5 = arith.constant 0 : index
    %c0_6 = arith.constant 0 : index
    %4 = vector.load %arg2[%c0_5, %c0_6] : memref<8x166xf32, #tpu.memory_space<vmem>>, vector<8x166xf32>
    %c0_7 = arith.constant 0 : index
    %c0_8 = arith.constant 0 : index
    %5 = vector.load %arg4[%c0_7, %c0_8] : memref<166x128xf32, #tpu.memory_space<vmem>>, vector<166x128xf32>
    %cst_9 = arith.constant dense<0.000000e+00> : vector<8x128xf32>
    %6 = tpu.matmul %4, %5, %cst_9 {dimension_numbers = #tpu.dot_dimension_numbers<[1], [0], [0], [1], [0, 0, 1, 1], [], []>} : vector<8x166xf32>, vector<166x128xf32>, vector<8x128xf32> -> vector<8x128xf32>
    %7 = arith.addf %3, %6 : vector<8x128xf32>
    %8 = vector.extract_strided_slice %0 {offsets = [0, 0], sizes = [1, 128], strides = [1, 1]} : vector<8x128xf32> to vector<1x128xf32>
    %9 = vector.broadcast %8 : vector<1x128xf32> to vector<8x128xf32>
    %10 = arith.addf %7, %9 : vector<8x128xf32>
    %cst_10 = arith.constant 0.000000e+00 : f32
    %11 = vector.broadcast %cst_10 : f32 to vector<8x128xf32>
    %12 = arith.maximumf %10, %11 : vector<8x128xf32>
    %c0_11 = arith.constant 0 : index
    %c0_12 = arith.constant 0 : index
    %c0_13 = arith.constant 0 : index
    %13 = vector.load %arg5[%c0_11, %c0_12, %c0_13] : memref<4x128x128xf32, #tpu.memory_space<vmem>>, vector<1x128x128xf32>
    %14 = vector.shape_cast %13 : vector<1x128x128xf32> to vector<128x128xf32>
    %cst_14 = arith.constant dense<0.000000e+00> : vector<8x128xf32>
    %15 = tpu.matmul %12, %14, %cst_14 {dimension_numbers = #tpu.dot_dimension_numbers<[1], [0], [0], [1], [0, 0, 1, 1], [], []>} : vector<8x128xf32>, vector<128x128xf32>, vector<8x128xf32> -> vector<8x128xf32>
    %16 = vector.extract_strided_slice %0 {offsets = [1, 0], sizes = [1, 128], strides = [1, 1]} : vector<8x128xf32> to vector<1x128xf32>
    %17 = vector.broadcast %16 : vector<1x128xf32> to vector<8x128xf32>
    %18 = arith.addf %15, %17 : vector<8x128xf32>
    %cst_15 = arith.constant 0.000000e+00 : f32
    %19 = vector.broadcast %cst_15 : f32 to vector<8x128xf32>
    %20 = arith.maximumf %18, %19 : vector<8x128xf32>
    %c1 = arith.constant 1 : index
    %c0_16 = arith.constant 0 : index
    %c0_17 = arith.constant 0 : index
    %21 = vector.load %arg5[%c1, %c0_16, %c0_17] : memref<4x128x128xf32, #tpu.memory_space<vmem>>, vector<1x128x128xf32>
    %22 = vector.shape_cast %21 : vector<1x128x128xf32> to vector<128x128xf32>
    %cst_18 = arith.constant dense<0.000000e+00> : vector<8x128xf32>
    %23 = tpu.matmul %20, %22, %cst_18 {dimension_numbers = #tpu.dot_dimension_numbers<[1], [0], [0], [1], [0, 0, 1, 1], [], []>} : vector<8x128xf32>, vector<128x128xf32>, vector<8x128xf32> -> vector<8x128xf32>
    %24 = vector.extract_strided_slice %0 {offsets = [2, 0], sizes = [1, 128], strides = [1, 1]} : vector<8x128xf32> to vector<1x128xf32>
    %25 = vector.broadcast %24 : vector<1x128xf32> to vector<8x128xf32>
    %26 = arith.addf %23, %25 : vector<8x128xf32>
    %cst_19 = arith.constant 0.000000e+00 : f32
    %27 = vector.broadcast %cst_19 : f32 to vector<8x128xf32>
    %28 = arith.maximumf %26, %27 : vector<8x128xf32>
    %c2 = arith.constant 2 : index
    %c0_20 = arith.constant 0 : index
    %c0_21 = arith.constant 0 : index
    %29 = vector.load %arg5[%c2, %c0_20, %c0_21] : memref<4x128x128xf32, #tpu.memory_space<vmem>>, vector<1x128x128xf32>
    %30 = vector.shape_cast %29 : vector<1x128x128xf32> to vector<128x128xf32>
    %cst_22 = arith.constant dense<0.000000e+00> : vector<8x128xf32>
    %31 = tpu.matmul %28, %30, %cst_22 {dimension_numbers = #tpu.dot_dimension_numbers<[1], [0], [0], [1], [0, 0, 1, 1], [], []>} : vector<8x128xf32>, vector<128x128xf32>, vector<8x128xf32> -> vector<8x128xf32>
    %32 = vector.extract_strided_slice %0 {offsets = [3, 0], sizes = [1, 128], strides = [1, 1]} : vector<8x128xf32> to vector<1x128xf32>
    %33 = vector.broadcast %32 : vector<1x128xf32> to vector<8x128xf32>
    %34 = arith.addf %31, %33 : vector<8x128xf32>
    %cst_23 = arith.constant 0.000000e+00 : f32
    %35 = vector.broadcast %cst_23 : f32 to vector<8x128xf32>
    %36 = arith.maximumf %34, %35 : vector<8x128xf32>
    %c3 = arith.constant 3 : index
    %c0_24 = arith.constant 0 : index
    %c0_25 = arith.constant 0 : index
    %37 = vector.load %arg5[%c3, %c0_24, %c0_25] : memref<4x128x128xf32, #tpu.memory_space<vmem>>, vector<1x128x128xf32>
    %38 = vector.shape_cast %37 : vector<1x128x128xf32> to vector<128x128xf32>
    %cst_26 = arith.constant dense<0.000000e+00> : vector<8x128xf32>
    %39 = tpu.matmul %36, %38, %cst_26 {dimension_numbers = #tpu.dot_dimension_numbers<[1], [0], [0], [1], [0, 0, 1, 1], [], []>} : vector<8x128xf32>, vector<128x128xf32>, vector<8x128xf32> -> vector<8x128xf32>
    %40 = vector.extract_strided_slice %0 {offsets = [4, 0], sizes = [1, 128], strides = [1, 1]} : vector<8x128xf32> to vector<1x128xf32>
    %41 = vector.broadcast %40 : vector<1x128xf32> to vector<8x128xf32>
    %42 = arith.addf %39, %41 : vector<8x128xf32>
    %cst_27 = arith.constant dense<0xFF800000> : vector<8xf32>
    %43 = vector.multi_reduction <maximumf>, %42, %cst_27 [1] : vector<8x128xf32> to vector<8xf32>
    %44 = vector.shape_cast %43 : vector<8xf32> to vector<8x1xf32>
    %45 = vector.broadcast %44 : vector<8x1xf32> to vector<8x128xf32>
    %46 = arith.subf %42, %45 : vector<8x128xf32>
    %47 = math.exp %46 : vector<8x128xf32>
    %cst_28 = arith.constant dense<0.000000e+00> : vector<8xf32>
    %48 = vector.multi_reduction <add>, %47, %cst_28 [1] : vector<8x128xf32> to vector<8xf32>
    %49 = vector.shape_cast %48 : vector<8xf32> to vector<8x1xf32>
    %50 = tpu.reciprocal %49 : vector<8x1xf32> -> vector<8x1xf32>
    %51 = vector.broadcast %50 : vector<8x1xf32> to vector<8x128xf32>
    %52 = arith.mulf %47, %51 : vector<8x128xf32>
    %c0_29 = arith.constant 0 : index
    %c0_30 = arith.constant 0 : index
    %53 = vector.load %arg7[%c0_29, %c0_30] : memref<8x128xf32, #tpu.memory_space<vmem>>, vector<8x128xf32>
    tpu.vector_store %arg7[%c0_29, %c0_30], %52 {strides = array<i32>} : memref<8x128xf32, #tpu.memory_space<vmem>>, vector<8x128xf32>,
    return
  }
  func.func @transform_0(%arg0: i32) -> (i32, i32) {
    %c0_i32 = arith.constant 0 : i32
    %c0_i32_0 = arith.constant 0 : i32
    return %arg0, %c0_i32 : i32, i32
  }
  func.func @transform_1(%arg0: i32) -> (i32, i32) {
    %c0_i32 = arith.constant 0 : i32
    %c0_i32_0 = arith.constant 0 : i32
    return %arg0, %c0_i32 : i32, i32
  }
  func.func @transform_2(%arg0: i32) -> (i32, i32) {
    %c0_i32 = arith.constant 0 : i32
    %c0_i32_0 = arith.constant 0 : i32
    %c0_i32_1 = arith.constant 0 : i32
    return %c0_i32, %c0_i32_0 : i32, i32
  }
  func.func @transform_3(%arg0: i32) -> (i32, i32) {
    %c0_i32 = arith.constant 0 : i32
    %c0_i32_0 = arith.constant 0 : i32
    %c0_i32_1 = arith.constant 0 : i32
    return %c0_i32, %c0_i32_0 : i32, i32
  }
  func.func @transform_4(%arg0: i32) -> (i32, i32, i32) {
    %c0_i32 = arith.constant 0 : i32
    %c0_i32_0 = arith.constant 0 : i32
    %c0_i32_1 = arith.constant 0 : i32
    %c0_i32_2 = arith.constant 0 : i32
    return %c0_i32, %c0_i32_0, %c0_i32_1 : i32, i32, i32
  }
  func.func @transform_5(%arg0: i32) -> (i32, i32) {
    %c0_i32 = arith.constant 0 : i32
    %c0_i32_0 = arith.constant 0 : i32
    %c0_i32_1 = arith.constant 0 : i32
    return %c0_i32, %c0_i32_0 : i32, i32
  }
  func.func @transform_6(%arg0: i32) -> (i32, i32) {
    %c0_i32 = arith.constant 0 : i32
    %c0_i32_0 = arith.constant 0 : i32
    return %arg0, %c0_i32 : i32, i32
  }
}

</mosaic_0001>

<llo_original>
// kernel: tpu_custom_call.1
$region0: #{tpu_custom_call.1}
  #allocation0 [shape = 'u32[]', space=smem, size = 0x4, offset = 0x4, fixed_abs, tag = 'smem constant byte address 0x4 - core index']
  #allocation1 [shape = 'u32[144,128]{1,0:T(1,128)}', space=vmem, size = 0x12000, scoped, tag = 'internal scratch']
  %s0 = inlined_call_operand.hbm [shape: f32[8,64], index: 0, kind: input, shape index: {}]
  %s1 = inlined_call_operand.hbm [shape: f32[8,166], index: 1, kind: input, shape index: {}]
  %s2 = inlined_call_operand.hbm [shape: f32[64,128], index: 2, kind: input, shape index: {}]
  %s3 = inlined_call_operand.hbm [shape: f32[166,128], index: 3, kind: input, shape index: {}]
  %s4 = inlined_call_operand.hbm [shape: f32[4,128,128], index: 4, kind: input, shape index: {}]
  %s5 = inlined_call_operand.vmem [shape: f32[8,128], index: 5, kind: input, shape index: {}]
  %s6 = inlined_call_operand.hbm [shape: f32[8,128], index: 6, kind: output, shape index: {}]
  %s7 = sld [smem:[#allocation0]]
  $region54: #{tpu_custom_call.1} parent=0
    _
  %s9 = ssub.s32 1, %s7
  %s10 = scalar_select 0, %s9, %s7
  $region1: #{tpu_custom_call.1} parent=0
    #allocation2 [shape = 'u8[4096]{0}', space=vmem, size = 0x1000, scoped, tag = 'input window, operand 0, single buffered']
    #allocation3 [shape = 's32[1]{0}', space=sflag, size = 0x4, scoped, tag = 'scoped memory for tpu_custom_call.1']
    #allocation4 [shape = 's32[1]{0}', space=sflag, size = 0x4, scoped, tag = 'scoped memory for tpu_custom_call.1']
    #allocation5 [shape = 'u8[8192]{0}', space=vmem, size = 0x2000, scoped, tag = 'input window, operand 1, single buffered']
    #allocation6 [shape = 's32[1]{0}', space=sflag, size = 0x4, scoped, tag = 'scoped memory for tpu_custom_call.1']
    #allocation7 [shape = 'u8[32768]{0}', space=vmem, size = 0x8000, scoped, tag = 'input window, operand 2, single buffered']
    #allocation8 [shape = 'u8[86016]{0}', space=vmem, size = 0x15000, scoped, tag = 'input window, operand 3, single buffered']
    #allocation9 [shape = 's32[1]{0}', space=sflag, size = 0x4, scoped, tag = 'scoped memory for tpu_custom_call.1']
    #allocation10 [shape = 'u8[262144]{0}', space=vmem, size = 0x40000, scoped, tag = 'input window, operand 4, single buffered']
    #allocation11 [shape = 'u8[4096]{0}', space=vmem, size = 0x1000, scoped, tag = 'output window, operand 0, single buffered']
    %11 = vsyncpa [#allocation3], 0
    %12 = vsyncpa [#allocation6], 0
    %13 = vsyncpa [#allocation9], 0
    %14 = vsyncpa [#allocation4], 0
    // Predicated region
    $region2: #{tpu_custom_call.1} parent=1 // pred_check
      _
    $region3: #{tpu_custom_call.1} parent=1 // pred_check_branch
      %16 = sbr.rel (0) target = $region5
    $region4: #{tpu_custom_call.1} parent=1 // pred_region
      %s18 = ssub.s32 128, 128
      %19 = vsyncadd [#allocation3], %s18
      %s21 = sshll.u32 [#allocation2], 4
      %s22 = int_to_ptr.vmem [resolvable:$true] %s21
      %24 = dma.hbm_to_vmem [thread:$0]  %s0, 128, %s22, [#allocation3]
    $region5: #{tpu_custom_call.1} parent=1 // pred_fallthru
      _
    // Predicated region
    $region6: #{tpu_custom_call.1} parent=1 // pred_check
      _
    $region7: #{tpu_custom_call.1} parent=1 // pred_check_branch
      %26 = sbr.rel (0) target = $region9
    $region8: #{tpu_custom_call.1} parent=1 // pred_region
      %s28 = ssub.s32 256, 256
      %29 = vsyncadd [#allocation6], %s28
      %s31 = sshll.u32 [#allocation5], 4
      %s32 = int_to_ptr.vmem [resolvable:$true] %s31
      %34 = dma.hbm_to_vmem [thread:$0]  %s1, 256, %s32, [#allocation6]
    $region9: #{tpu_custom_call.1} parent=1 // pred_fallthru
      _
    // Predicated region
    $region10: #{tpu_custom_call.1} parent=1 // pred_check
      _
    $region11: #{tpu_custom_call.1} parent=1 // pred_check_branch
      %36 = sbr.rel (0) target = $region13
    $region12: #{tpu_custom_call.1} parent=1 // pred_region
      %s38 = ssub.s32 1024, 1024
      %39 = vsyncadd [#allocation6], %s38
      %s40 = sshll.u32 [#allocation7], 4
      %s41 = int_to_ptr.vmem [resolvable:$true] %s40
      %46 = dma.hbm_to_vmem [thread:$0]  %s2, 1024, %s41, [#allocation6], 128, 128, 8
    $region13: #{tpu_custom_call.1} parent=1 // pred_fallthru
      _
    // Predicated region
    $region14: #{tpu_custom_call.1} parent=1 // pred_check
      _
    $region15: #{tpu_custom_call.1} parent=1 // pred_check_branch
      %48 = sbr.rel (0) target = $region17
    $region16: #{tpu_custom_call.1} parent=1 // pred_region
      %s50 = ssub.s32 2688, 2688
      %51 = vsyncadd [#allocation9], %s50
      %s52 = sshll.u32 [#allocation8], 4
      %s53 = int_to_ptr.vmem [resolvable:$true] %s52
      %58 = dma.hbm_to_vmem [thread:$0]  %s3, 2688, %s53, [#allocation9], 128, 128, 8
    $region17: #{tpu_custom_call.1} parent=1 // pred_fallthru
      _
    // Predicated region
    $region18: #{tpu_custom_call.1} parent=1 // pred_check
      _
    $region19: #{tpu_custom_call.1} parent=1 // pred_check_branch
      %60 = sbr.rel (0) target = $region21
    $region20: #{tpu_custom_call.1} parent=1 // pred_region
      %s62 = ssub.s32 8192, 8192
      %63 = vsyncadd [#allocation9], %s62
      %s64 = sshll.u32 [#allocation10], 4
      %s65 = int_to_ptr.vmem [resolvable:$true] %s64
      %70 = dma.hbm_to_vmem [thread:$0]  %s4, 8192, %s65, [#allocation9], 128, 128, 8
    $region21: #{tpu_custom_call.1} parent=1 // pred_fallthru
      _
    // Predicated region
    $region22: #{tpu_custom_call.1} parent=1 // pred_check
      _
    $region23: #{tpu_custom_call.1} parent=1 // pred_check_branch
      %72 = sbr.rel (0) target = $region25
    $region24: #{tpu_custom_call.1} parent=1 // pred_region
      _
    $region25: #{tpu_custom_call.1} parent=1 // pred_fallthru
      _
    // Predicated region
    $region26: #{tpu_custom_call.1} parent=1 // pred_check
      _
    $region27: #{tpu_custom_call.1} parent=1 // pred_check_branch
      %74 = sbr.rel (0) target = $region29
    $region28: #{tpu_custom_call.1} parent=1 // pred_region
      %75 = dma.done [#allocation3], 128
    $region29: #{tpu_custom_call.1} parent=1 // pred_fallthru
      _
    // Predicated region
    $region30: #{tpu_custom_call.1} parent=1 // pred_check
      _
    $region31: #{tpu_custom_call.1} parent=1 // pred_check_branch
      %77 = sbr.rel (0) target = $region33
    $region32: #{tpu_custom_call.1} parent=1 // pred_region
      %78 = dma.done [#allocation6], 256
    $region33: #{tpu_custom_call.1} parent=1 // pred_fallthru
      _
    // Predicated region
    $region34: #{tpu_custom_call.1} parent=1 // pred_check
      _
    $region35: #{tpu_custom_call.1} parent=1 // pred_check_branch
      %80 = sbr.rel (0) target = $region37
    $region36: #{tpu_custom_call.1} parent=1 // pred_region
      %81 = dma.done [#allocation6], 1024
    $region37: #{tpu_custom_call.1} parent=1 // pred_fallthru
      _
    // Predicated region
    $region38: #{tpu_custom_call.1} parent=1 // pred_check
      _
    $region39: #{tpu_custom_call.1} parent=1 // pred_check_branch
      %83 = sbr.rel (0) target = $region41
    $region40: #{tpu_custom_call.1} parent=1 // pred_region
      %84 = dma.done [#allocation9], 2688
    $region41: #{tpu_custom_call.1} parent=1 // pred_fallthru
      _
    // Predicated region
    $region42: #{tpu_custom_call.1} parent=1 // pred_check
      _
    $region43: #{tpu_custom_call.1} parent=1 // pred_check_branch
      %86 = sbr.rel (0) target = $region45
    $region44: #{tpu_custom_call.1} parent=1 // pred_region
      %87 = dma.done [#allocation9], 8192
    $region45: #{tpu_custom_call.1} parent=1 // pred_fallthru
      _
    %v88 = vld [vmem:[%s5] sm:$0xff]
    %v89 = vld [vmem:[#allocation2] sm:$0xff]
    %v90 = vld [vmem:[#allocation7] sm:$0xff]
    %v91 = vld [vmem:[#allocation7 + $0x8] sm:$0xff]
    %v92 = vld [vmem:[#allocation7 + $0x10] sm:$0xff]
    %v93 = vld [vmem:[#allocation7 + $0x18] sm:$0xff]
    %v94 = vld [vmem:[#allocation7 + $0x20] sm:$0xff]
    %v95 = vld [vmem:[#allocation7 + $0x28] sm:$0xff]
    %v96 = vld [vmem:[#allocation7 + $0x30] sm:$0xff]
    %v97 = vld [vmem:[#allocation7 + $0x38] sm:$0xff]
    %v98 = vld [vmem:[#allocation5] sm:$0xff]
    %v99 = vld [vmem:[#allocation5 + $0x8] sm:$0xff]
    %v100 = vld [vmem:[#allocation8] sm:$0xff]
    %v101 = vld [vmem:[#allocation8 + $0x8] sm:$0xff]
    %v102 = vld [vmem:[#allocation8 + $0x10] sm:$0xff]
    %v103 = vld [vmem:[#allocation8 + $0x18] sm:$0xff]
    %v104 = vld [vmem:[#allocation8 + $0x20] sm:$0xff]
    %v105 = vld [vmem:[#allocation8 + $0x28] sm:$0xff]
    %v106 = vld [vmem:[#allocation8 + $0x30] sm:$0xff]
    %v107 = vld [vmem:[#allocation8 + $0x38] sm:$0xff]
    %v108 = vld [vmem:[#allocation8 + $0x40] sm:$0xff]
    %v109 = vld [vmem:[#allocation8 + $0x48] sm:$0xff]
    %v110 = vld [vmem:[#allocation8 + $0x50] sm:$0xff]
    %v111 = vld [vmem:[#allocation8 + $0x58] sm:$0xff]
    %v112 = vld [vmem:[#allocation8 + $0x60] sm:$0xff]
    %v113 = vld [vmem:[#allocation8 + $0x68] sm:$0xff]
    %v114 = vld [vmem:[#allocation8 + $0x70] sm:$0xff]
    %v115 = vld [vmem:[#allocation8 + $0x78] sm:$0xff]
    %v116 = vld [vmem:[#allocation8 + $0x80] sm:$0xff]
    %v117 = vld [vmem:[#allocation8 + $0x88] sm:$0xff]
    %v118 = vld [vmem:[#allocation8 + $0x90] sm:$0xff]
    %v119 = vld [vmem:[#allocation8 + $0x98] sm:$0xff]
    %v120 = vld [vmem:[#allocation8 + $0xa0] sm:$0x3f]
    %vm121 = vcmask 310272
    %v123 = vsel %vm121, %v99, 0
    %vm125 = vcmask 1045504
    %v127 = vsel %vm125, %v120, 0
    %129 = vmatprep.subr.mxu0 0.0
    %130 = vmatpush1.msra.mxu0 %v100
    %131 = vmatprep.subr.mxu0 0.0
    %132 = vmatpush1.msra.mxu0 %v101
    %133 = vmatprep.subr.mxu0 0.0
    %134 = vmatpush1.msra.mxu0 %v102
    %135 = vmatprep.subr.mxu0 0.0
    %136 = vmatpush1.msra.mxu0 %v103
    %137 = vmatprep.subr.mxu0 0.0
    %138 = vmatpush1.msra.mxu0 %v104
    %139 = vmatprep.subr.mxu0 0.0
    %140 = vmatpush1.msra.mxu0 %v105
    %141 = vmatprep.subr.mxu0 0.0
    %142 = vmatpush1.msra.mxu0 %v106
    %143 = vmatprep.subr.mxu0 0.0
    %144 = vmatpush1.msra.mxu0 %v107
    %145 = vmatprep.subr.mxu0 0.0
    %146 = vmatpush1.msra.mxu0 %v108
    %147 = vmatprep.subr.mxu0 0.0
    %148 = vmatpush1.msra.mxu0 %v109
    %149 = vmatprep.subr.mxu0 0.0
    %150 = vmatpush1.msra.mxu0 %v110
    %151 = vmatprep.subr.mxu0 0.0
    %152 = vmatpush1.msra.mxu0 %v111
    %153 = vmatprep.subr.mxu0 0.0
    %154 = vmatpush1.msra.mxu0 %v112
    %155 = vmatprep.subr.mxu0 0.0
    %156 = vmatpush1.msra.mxu0 %v113
    %157 = vmatprep.subr.mxu0 0.0
    %158 = vmatpush1.msra.mxu0 %v114
    %159 = vmatprep.subr.mxu0 0.0
    %160 = vmatpush1.msra.mxu0 %v115
    %161 = vmatprep.subr.mxu0 0.0
    %162 = vmatpush1.msra.mxu0 %v116
    %163 = vmatprep.subr.mxu0 0.0
    %164 = vmatpush1.msra.mxu0 %v117
    %165 = vmatprep.subr.mxu0 0.0
    %166 = vmatpush1.msra.mxu0 %v118
    %167 = vmatprep.subr.mxu0 0.0
    %168 = vmatpush1.msra.mxu0 %v119
    %169 = vmatprep.subr.mxu0 0.0
    %170 = vmatpush1.msra.mxu0 %v127
    %171 = vmatprep.subr.mxu0 0.0
    %172 = vmatpush1.msra.mxu0 0.0
    %173 = vmatprep.subr.mxu0 0.0
    %174 = vmatpush1.msra.mxu0 0.0
    %175 = vmatprep.subr.mxu0 0.0
    %176 = vmatpush1.msra.mxu0 0.0
    %177 = vmatprep.subr.mxu0 0.0
    %178 = vmatpush1.msra.mxu0 0.0
    %179 = vmatprep.subr.mxu0 0.0
    %180 = vmatpush1.msra.mxu0 0.0
    %181 = vmatprep.subr.mxu0 0.0
    %182 = vmatpush1.msra.mxu0 0.0
    %183 = vmatprep.subr.mxu0 0.0
    %184 = vmatpush1.msra.mxu0 0.0
    %185 = vmatprep.subr.mxu0 0.0
    %186 = vmatpush1.msra.mxu0 0.0
    %187 = vmatprep.subr.mxu0 0.0
    %188 = vmatpush1.msra.mxu0 0.0
    %189 = vmatprep.subr.mxu0 0.0
    %190 = vmatpush1.msra.mxu0 0.0
    %191 = vmatprep.subr.mxu0 0.0
    %192 = vmatpush1.msra.mxu0 0.0
    %193 = vmatprep.mubr.f32.mxu0 %v123
    %194 = vmatmul.mubr.f32.gmra.mrb[0].mxu0 %v98
    %v195 = vpop.f32.mrb[0].mxu0
    %v196 = vadd.f32 0.0, %v195
    %v197 = vpop.f32.mrb[0].mxu0
    %198 = vdwg.mxu0
    %vm199 = vcmask 523264
    %v201 = vsel %vm199, %v89, 0
    %203 = vmatprep.subr.mxu0 0.0
    %204 = vmatpush1.msra.mxu0 %v90
    %205 = vmatprep.subr.mxu0 0.0
    %206 = vmatpush1.msra.mxu0 %v91
    %207 = vmatprep.subr.mxu0 0.0
    %208 = vmatpush1.msra.mxu0 %v92
    %209 = vmatprep.subr.mxu0 0.0
    %210 = vmatpush1.msra.mxu0 %v93
    %211 = vmatprep.subr.mxu0 0.0
    %212 = vmatpush1.msra.mxu0 %v94
    %213 = vmatprep.subr.mxu0 0.0
    %214 = vmatpush1.msra.mxu0 %v95
    %215 = vmatprep.subr.mxu0 0.0
    %216 = vmatpush1.msra.mxu0 %v96
    %217 = vmatprep.subr.mxu0 0.0
    %218 = vmatpush1.msra.mxu0 %v97
    %219 = vmatprep.subr.mxu0 0.0
    %220 = vmatpush1.msra.mxu0 0.0
    %221 = vmatprep.subr.mxu0 0.0
    %222 = vmatpush1.msra.mxu0 0.0
    %223 = vmatprep.subr.mxu0 0.0
    %224 = vmatpush1.msra.mxu0 0.0
    %225 = vmatprep.subr.mxu0 0.0
    %226 = vmatpush1.msra.mxu0 0.0
    %227 = vmatprep.subr.mxu0 0.0
    %228 = vmatpush1.msra.mxu0 0.0
    %229 = vmatprep.subr.mxu0 0.0
    %230 = vmatpush1.msra.mxu0 0.0
    %231 = vmatprep.subr.mxu0 0.0
    %232 = vmatpush1.msra.mxu0 0.0
    %233 = vmatprep.subr.mxu0 0.0
    %234 = vmatpush1.msra.mxu0 0.0
    %235 = vmatprep.subr.mxu0 0.0
    %236 = vmatpush1.msra.mxu0 0.0
    %237 = vmatprep.subr.mxu0 0.0
    %238 = vmatpush1.msra.mxu0 0.0
    %239 = vmatprep.subr.mxu0 0.0
    %240 = vmatpush1.msra.mxu0 0.0
    %241 = vmatprep.subr.mxu0 0.0
    %242 = vmatpush1.msra.mxu0 0.0
    %243 = vmatprep.subr.mxu0 0.0
    %244 = vmatpush1.msra.mxu0 0.0
    %245 = vmatprep.subr.mxu0 0.0
    %246 = vmatpush1.msra.mxu0 0.0
    %247 = vmatprep.subr.mxu0 0.0
    %248 = vmatpush1.msra.mxu0 0.0
    %249 = vmatprep.subr.mxu0 0.0
    %250 = vmatpush1.msra.mxu0 0.0
    %251 = vmatprep.subr.mxu0 0.0
    %252 = vmatpush1.msra.mxu0 0.0
    %253 = vmatprep.subr.mxu0 0.0
    %254 = vmatpush1.msra.mxu0 0.0
    %255 = vmatprep.subr.mxu0 0.0
    %256 = vmatpush1.msra.mxu0 0.0
    %257 = vmatprep.subr.mxu0 0.0
    %258 = vmatpush1.msra.mxu0 0.0
    %259 = vmatprep.subr.mxu0 0.0
    %260 = vmatpush1.msra.mxu0 0.0
    %261 = vmatprep.subr.mxu0 0.0
    %262 = vmatpush1.msra.mxu0 0.0
    %263 = vmatprep.subr.mxu0 0.0
    %264 = vmatpush1.msra.mxu0 0.0
    %265 = vmatprep.subr.mxu0 0.0
    %266 = vmatpush1.msra.mxu0 0.0
    %267 = vmatprep.mubr.f32.mxu0 0.0
    %268 = vmatmul.mubr.f32.gmra.mrb[0].mxu0 %v201
    %v269 = vpop.f32.mrb[0].mxu0
    %v270 = vadd.f32 %v196, %v269
    %v271 = vpop.f32.mrb[0].mxu0
    %272 = vdwg.mxu0
    %v273 = vlaneseq
    %v274 = vshrl.u32 %v273, 7
    %v275 = vsub.s32 0, %v274
    %v276 = vrot.slane %v88, %v275
    %v277 = vadd.f32 %v270, %v276
    %v278 = vmax.f32 %v277, 0.0
    %v279 = vld [vmem:[#allocation10] sm:$0xff]
    %v280 = vld [vmem:[#allocation10 + $0x8] sm:$0xff]
    %v281 = vld [vmem:[#allocation10 + $0x10] sm:$0xff]
    %v282 = vld [vmem:[#allocation10 + $0x18] sm:$0xff]
    %v283 = vld [vmem:[#allocation10 + $0x20] sm:$0xff]
    %v284 = vld [vmem:[#allocation10 + $0x28] sm:$0xff]
    %v285 = vld [vmem:[#allocation10 + $0x30] sm:$0xff]
    %v286 = vld [vmem:[#allocation10 + $0x38] sm:$0xff]
    %v287 = vld [vmem:[#allocation10 + $0x40] sm:$0xff]
    %v288 = vld [vmem:[#allocation10 + $0x48] sm:$0xff]
    %v289 = vld [vmem:[#allocation10 + $0x50] sm:$0xff]
    %v290 = vld [vmem:[#allocation10 + $0x58] sm:$0xff]
    %v291 = vld [vmem:[#allocation10 + $0x60] sm:$0xff]
    %v292 = vld [vmem:[#allocation10 + $0x68] sm:$0xff]
    %v293 = vld [vmem:[#allocation10 + $0x70] sm:$0xff]
    %v294 = vld [vmem:[#allocation10 + $0x78] sm:$0xff]
    %v295 = vlaneseq
    %v296 = vshrl.u32 %v295, 7
    %v297 = vsub.s32 1, %v296
    %v298 = vrot.slane %v88, %v297
    %299 = vmatprep.subr.mxu0 0.0
    %300 = vmatpush1.msra.mxu0 %v279
    %301 = vmatprep.subr.mxu0 0.0
    %302 = vmatpush1.msra.mxu0 %v280
    %303 = vmatprep.subr.mxu0 0.0
    %304 = vmatpush1.msra.mxu0 %v281
    %305 = vmatprep.subr.mxu0 0.0
    %306 = vmatpush1.msra.mxu0 %v282
    %307 = vmatprep.subr.mxu0 0.0
    %308 = vmatpush1.msra.mxu0 %v283
    %309 = vmatprep.subr.mxu0 0.0
    %310 = vmatpush1.msra.mxu0 %v284
    %311 = vmatprep.subr.mxu0 0.0
    %312 = vmatpush1.msra.mxu0 %v285
    %313 = vmatprep.subr.mxu0 0.0
    %314 = vmatpush1.msra.mxu0 %v286
    %315 = vmatprep.subr.mxu0 0.0
    %316 = vmatpush1.msra.mxu0 %v287
    %317 = vmatprep.subr.mxu0 0.0
    %318 = vmatpush1.msra.mxu0 %v288
    %319 = vmatprep.subr.mxu0 0.0
    %320 = vmatpush1.msra.mxu0 %v289
    %321 = vmatprep.subr.mxu0 0.0
    %322 = vmatpush1.msra.mxu0 %v290
    %323 = vmatprep.subr.mxu0 0.0
    %324 = vmatpush1.msra.mxu0 %v291
    %325 = vmatprep.subr.mxu0 0.0
    %326 = vmatpush1.msra.mxu0 %v292
    %327 = vmatprep.subr.mxu0 0.0
    %328 = vmatpush1.msra.mxu0 %v293
    %329 = vmatprep.subr.mxu0 0.0
    %330 = vmatpush1.msra.mxu0 %v294
    %331 = vmatprep.subr.mxu0 0.0
    %332 = vmatpush1.msra.mxu0 0.0
    %333 = vmatprep.subr.mxu0 0.0
    %334 = vmatpush1.msra.mxu0 0.0
    %335 = vmatprep.subr.mxu0 0.0
    %336 = vmatpush1.msra.mxu0 0.0
    %337 = vmatprep.subr.mxu0 0.0
    %338 = vmatpush1.msra.mxu0 0.0
    %339 = vmatprep.subr.mxu0 0.0
    %340 = vmatpush1.msra.mxu0 0.0
    %341 = vmatprep.subr.mxu0 0.0
    %342 = vmatpush1.msra.mxu0 0.0
    %343 = vmatprep.subr.mxu0 0.0
    %344 = vmatpush1.msra.mxu0 0.0
    %345 = vmatprep.subr.mxu0 0.0
    %346 = vmatpush1.msra.mxu0 0.0
    %347 = vmatprep.subr.mxu0 0.0
    %348 = vmatpush1.msra.mxu0 0.0
    %349 = vmatprep.subr.mxu0 0.0
    %350 = vmatpush1.msra.mxu0 0.0
    %351 = vmatprep.subr.mxu0 0.0
    %352 = vmatpush1.msra.mxu0 0.0
    %353 = vmatprep.subr.mxu0 0.0
    %354 = vmatpush1.msra.mxu0 0.0
    %355 = vmatprep.subr.mxu0 0.0
    %356 = vmatpush1.msra.mxu0 0.0
    %357 = vmatprep.subr.mxu0 0.0
    %358 = vmatpush1.msra.mxu0 0.0
    %359 = vmatprep.subr.mxu0 0.0
    %360 = vmatpush1.msra.mxu0 0.0
    %361 = vmatprep.subr.mxu0 0.0
    %362 = vmatpush1.msra.mxu0 0.0
    %363 = vmatprep.mubr.f32.mxu0 0.0
    %364 = vmatmul.mubr.f32.gmra.mrb[0].mxu0 %v278
    %v365 = vpop.f32.mrb[0].mxu0
    %v366 = vadd.f32 %v298, %v365
    %v367 = vpop.f32.mrb[0].mxu0
    %368 = vdwg.mxu0
    %v369 = vmax.f32 %v366, 0.0
    %s370 = scalar_lea.vmem [#allocation10], 128
    %v371 = vld [vmem:[%s370] sm:$0xff]
    %v372 = vld [vmem:[%s370 + $0x8] sm:$0xff]
    %v373 = vld [vmem:[%s370 + $0x10] sm:$0xff]
    %v374 = vld [vmem:[%s370 + $0x18] sm:$0xff]
    %v375 = vld [vmem:[%s370 + $0x20] sm:$0xff]
    %v376 = vld [vmem:[%s370 + $0x28] sm:$0xff]
    %v377 = vld [vmem:[%s370 + $0x30] sm:$0xff]
    %v378 = vld [vmem:[%s370 + $0x38] sm:$0xff]
    %v379 = vld [vmem:[%s370 + $0x40] sm:$0xff]
    %v380 = vld [vmem:[%s370 + $0x48] sm:$0xff]
    %v381 = vld [vmem:[%s370 + $0x50] sm:$0xff]
    %v382 = vld [vmem:[%s370 + $0x58] sm:$0xff]
    %v383 = vld [vmem:[%s370 + $0x60] sm:$0xff]
    %v384 = vld [vmem:[%s370 + $0x68] sm:$0xff]
    %v385 = vld [vmem:[%s370 + $0x70] sm:$0xff]
    %v386 = vld [vmem:[%s370 + $0x78] sm:$0xff]
    %v387 = vlaneseq
    %v388 = vshrl.u32 %v387, 7
    %v389 = vsub.s32 2, %v388
    %v390 = vrot.slane %v88, %v389
    %391 = vmatprep.subr.mxu0 0.0
    %392 = vmatpush1.msra.mxu0 %v371
    %393 = vmatprep.subr.mxu0 0.0
    %394 = vmatpush1.msra.mxu0 %v372
    %395 = vmatprep.subr.mxu0 0.0
    %396 = vmatpush1.msra.mxu0 %v373
    %397 = vmatprep.subr.mxu0 0.0
    %398 = vmatpush1.msra.mxu0 %v374
    %399 = vmatprep.subr.mxu0 0.0
    %400 = vmatpush1.msra.mxu0 %v375
    %401 = vmatprep.subr.mxu0 0.0
    %402 = vmatpush1.msra.mxu0 %v376
    %403 = vmatprep.subr.mxu0 0.0
    %404 = vmatpush1.msra.mxu0 %v377
    %405 = vmatprep.subr.mxu0 0.0
    %406 = vmatpush1.msra.mxu0 %v378
    %407 = vmatprep.subr.mxu0 0.0
    %408 = vmatpush1.msra.mxu0 %v379
    %409 = vmatprep.subr.mxu0 0.0
    %410 = vmatpush1.msra.mxu0 %v380
    %411 = vmatprep.subr.mxu0 0.0
    %412 = vmatpush1.msra.mxu0 %v381
    %413 = vmatprep.subr.mxu0 0.0
    %414 = vmatpush1.msra.mxu0 %v382
    %415 = vmatprep.subr.mxu0 0.0
    %416 = vmatpush1.msra.mxu0 %v383
    %417 = vmatprep.subr.mxu0 0.0
    %418 = vmatpush1.msra.mxu0 %v384
    %419 = vmatprep.subr.mxu0 0.0
    %420 = vmatpush1.msra.mxu0 %v385
    %421 = vmatprep.subr.mxu0 0.0
    %422 = vmatpush1.msra.mxu0 %v386
    %423 = vmatprep.subr.mxu0 0.0
    %424 = vmatpush1.msra.mxu0 0.0
    %425 = vmatprep.subr.mxu0 0.0
    %426 = vmatpush1.msra.mxu0 0.0
    %427 = vmatprep.subr.mxu0 0.0
    %428 = vmatpush1.msra.mxu0 0.0
    %429 = vmatprep.subr.mxu0 0.0
    %430 = vmatpush1.msra.mxu0 0.0
    %431 = vmatprep.subr.mxu0 0.0
    %432 = vmatpush1.msra.mxu0 0.0
    %433 = vmatprep.subr.mxu0 0.0
    %434 = vmatpush1.msra.mxu0 0.0
    %435 = vmatprep.subr.mxu0 0.0
    %436 = vmatpush1.msra.mxu0 0.0
    %437 = vmatprep.subr.mxu0 0.0
    %438 = vmatpush1.msra.mxu0 0.0
    %439 = vmatprep.subr.mxu0 0.0
    %440 = vmatpush1.msra.mxu0 0.0
    %441 = vmatprep.subr.mxu0 0.0
    %442 = vmatpush1.msra.mxu0 0.0
    %443 = vmatprep.subr.mxu0 0.0
    %444 = vmatpush1.msra.mxu0 0.0
    %445 = vmatprep.subr.mxu0 0.0
    %446 = vmatpush1.msra.mxu0 0.0
    %447 = vmatprep.subr.mxu0 0.0
    %448 = vmatpush1.msra.mxu0 0.0
    %449 = vmatprep.subr.mxu0 0.0
    %450 = vmatpush1.msra.mxu0 0.0
    %451 = vmatprep.subr.mxu0 0.0
    %452 = vmatpush1.msra.mxu0 0.0
    %453 = vmatprep.subr.mxu0 0.0
    %454 = vmatpush1.msra.mxu0 0.0
    %455 = vmatprep.mubr.f32.mxu0 0.0
    %456 = vmatmul.mubr.f32.gmra.mrb[0].mxu0 %v369
    %v457 = vpop.f32.mrb[0].mxu0
    %v458 = vadd.f32 %v390, %v457
    %v459 = vpop.f32.mrb[0].mxu0
    %460 = vdwg.mxu0
    %v461 = vmax.f32 %v458, 0.0
    %s462 = scalar_lea.vmem [#allocation10], 256
    %v463 = vld [vmem:[%s462] sm:$0xff]
    %v464 = vld [vmem:[%s462 + $0x8] sm:$0xff]
    %v465 = vld [vmem:[%s462 + $0x10] sm:$0xff]
    %v466 = vld [vmem:[%s462 + $0x18] sm:$0xff]
    %v467 = vld [vmem:[%s462 + $0x20] sm:$0xff]
    %v468 = vld [vmem:[%s462 + $0x28] sm:$0xff]
    %v469 = vld [vmem:[%s462 + $0x30] sm:$0xff]
    %v470 = vld [vmem:[%s462 + $0x38] sm:$0xff]
    %v471 = vld [vmem:[%s462 + $0x40] sm:$0xff]
    %v472 = vld [vmem:[%s462 + $0x48] sm:$0xff]
    %v473 = vld [vmem:[%s462 + $0x50] sm:$0xff]
    %v474 = vld [vmem:[%s462 + $0x58] sm:$0xff]
    %v475 = vld [vmem:[%s462 + $0x60] sm:$0xff]
    %v476 = vld [vmem:[%s462 + $0x68] sm:$0xff]
    %v477 = vld [vmem:[%s462 + $0x70] sm:$0xff]
    %v478 = vld [vmem:[%s462 + $0x78] sm:$0xff]
    %v479 = vlaneseq
    %v480 = vshrl.u32 %v479, 7
    %v481 = vsub.s32 3, %v480
    %v482 = vrot.slane %v88, %v481
    %483 = vmatprep.subr.mxu0 0.0
    %484 = vmatpush1.msra.mxu0 %v463
    %485 = vmatprep.subr.mxu0 0.0
    %486 = vmatpush1.msra.mxu0 %v464
    %487 = vmatprep.subr.mxu0 0.0
    %488 = vmatpush1.msra.mxu0 %v465
    %489 = vmatprep.subr.mxu0 0.0
    %490 = vmatpush1.msra.mxu0 %v466
    %491 = vmatprep.subr.mxu0 0.0
    %492 = vmatpush1.msra.mxu0 %v467
    %493 = vmatprep.subr.mxu0 0.0
    %494 = vmatpush1.msra.mxu0 %v468
    %495 = vmatprep.subr.mxu0 0.0
    %496 = vmatpush1.msra.mxu0 %v469
    %497 = vmatprep.subr.mxu0 0.0
    %498 = vmatpush1.msra.mxu0 %v470
    %499 = vmatprep.subr.mxu0 0.0
    %500 = vmatpush1.msra.mxu0 %v471
    %501 = vmatprep.subr.mxu0 0.0
    %502 = vmatpush1.msra.mxu0 %v472
    %503 = vmatprep.subr.mxu0 0.0
    %504 = vmatpush1.msra.mxu0 %v473
    %505 = vmatprep.subr.mxu0 0.0
    %506 = vmatpush1.msra.mxu0 %v474
    %507 = vmatprep.subr.mxu0 0.0
    %508 = vmatpush1.msra.mxu0 %v475
    %509 = vmatprep.subr.mxu0 0.0
    %510 = vmatpush1.msra.mxu0 %v476
    %511 = vmatprep.subr.mxu0 0.0
    %512 = vmatpush1.msra.mxu0 %v477
    %513 = vmatprep.subr.mxu0 0.0
    %514 = vmatpush1.msra.mxu0 %v478
    %515 = vmatprep.subr.mxu0 0.0
    %516 = vmatpush1.msra.mxu0 0.0
    %517 = vmatprep.subr.mxu0 0.0
    %518 = vmatpush1.msra.mxu0 0.0
    %519 = vmatprep.subr.mxu0 0.0
    %520 = vmatpush1.msra.mxu0 0.0
    %521 = vmatprep.subr.mxu0 0.0
    %522 = vmatpush1.msra.mxu0 0.0
    %523 = vmatprep.subr.mxu0 0.0
    %524 = vmatpush1.msra.mxu0 0.0
    %525 = vmatprep.subr.mxu0 0.0
    %526 = vmatpush1.msra.mxu0 0.0
    %527 = vmatprep.subr.mxu0 0.0
    %528 = vmatpush1.msra.mxu0 0.0
    %529 = vmatprep.subr.mxu0 0.0
    %530 = vmatpush1.msra.mxu0 0.0
    %531 = vmatprep.subr.mxu0 0.0
    %532 = vmatpush1.msra.mxu0 0.0
    %533 = vmatprep.subr.mxu0 0.0
    %534 = vmatpush1.msra.mxu0 0.0
    %535 = vmatprep.subr.mxu0 0.0
    %536 = vmatpush1.msra.mxu0 0.0
    %537 = vmatprep.subr.mxu0 0.0
    %538 = vmatpush1.msra.mxu0 0.0
    %539 = vmatprep.subr.mxu0 0.0
    %540 = vmatpush1.msra.mxu0 0.0
    %541 = vmatprep.subr.mxu0 0.0
    %542 = vmatpush1.msra.mxu0 0.0
    %543 = vmatprep.subr.mxu0 0.0
    %544 = vmatpush1.msra.mxu0 0.0
    %545 = vmatprep.subr.mxu0 0.0
    %546 = vmatpush1.msra.mxu0 0.0
    %547 = vmatprep.mubr.f32.mxu0 0.0
    %548 = vmatmul.mubr.f32.gmra.mrb[0].mxu0 %v461
    %v549 = vpop.f32.mrb[0].mxu0
    %v550 = vadd.f32 %v482, %v549
    %v551 = vpop.f32.mrb[0].mxu0
    %552 = vdwg.mxu0
    %v553 = vmax.f32 %v550, 0.0
    %s554 = scalar_lea.vmem [#allocation10], 384
    %v555 = vld [vmem:[%s554] sm:$0xff]
    %v556 = vld [vmem:[%s554 + $0x8] sm:$0xff]
    %v557 = vld [vmem:[%s554 + $0x10] sm:$0xff]
    %v558 = vld [vmem:[%s554 + $0x18] sm:$0xff]
    %v559 = vld [vmem:[%s554 + $0x20] sm:$0xff]
    %v560 = vld [vmem:[%s554 + $0x28] sm:$0xff]
    %v561 = vld [vmem:[%s554 + $0x30] sm:$0xff]
    %v562 = vld [vmem:[%s554 + $0x38] sm:$0xff]
    %v563 = vld [vmem:[%s554 + $0x40] sm:$0xff]
    %v564 = vld [vmem:[%s554 + $0x48] sm:$0xff]
    %v565 = vld [vmem:[%s554 + $0x50] sm:$0xff]
    %v566 = vld [vmem:[%s554 + $0x58] sm:$0xff]
    %v567 = vld [vmem:[%s554 + $0x60] sm:$0xff]
    %v568 = vld [vmem:[%s554 + $0x68] sm:$0xff]
    %v569 = vld [vmem:[%s554 + $0x70] sm:$0xff]
    %v570 = vld [vmem:[%s554 + $0x78] sm:$0xff]
    %v571 = vlaneseq
    %v572 = vshrl.u32 %v571, 7
    %v573 = vsub.s32 4, %v572
    %v574 = vrot.slane %v88, %v573
    %575 = vmatprep.subr.mxu0 0.0
    %576 = vmatpush1.msra.mxu0 %v555
    %577 = vmatprep.subr.mxu0 0.0
    %578 = vmatpush1.msra.mxu0 %v556
    %579 = vmatprep.subr.mxu0 0.0
    %580 = vmatpush1.msra.mxu0 %v557
    %581 = vmatprep.subr.mxu0 0.0
    %582 = vmatpush1.msra.mxu0 %v558
    %583 = vmatprep.subr.mxu0 0.0
    %584 = vmatpush1.msra.mxu0 %v559
    %585 = vmatprep.subr.mxu0 0.0
    %586 = vmatpush1.msra.mxu0 %v560
    %587 = vmatprep.subr.mxu0 0.0
    %588 = vmatpush1.msra.mxu0 %v561
    %589 = vmatprep.subr.mxu0 0.0
    %590 = vmatpush1.msra.mxu0 %v562
    %591 = vmatprep.subr.mxu0 0.0
    %592 = vmatpush1.msra.mxu0 %v563
    %593 = vmatprep.subr.mxu0 0.0
    %594 = vmatpush1.msra.mxu0 %v564
    %595 = vmatprep.subr.mxu0 0.0
    %596 = vmatpush1.msra.mxu0 %v565
    %597 = vmatprep.subr.mxu0 0.0
    %598 = vmatpush1.msra.mxu0 %v566
    %599 = vmatprep.subr.mxu0 0.0
    %600 = vmatpush1.msra.mxu0 %v567
    %601 = vmatprep.subr.mxu0 0.0
    %602 = vmatpush1.msra.mxu0 %v568
    %603 = vmatprep.subr.mxu0 0.0
    %604 = vmatpush1.msra.mxu0 %v569
    %605 = vmatprep.subr.mxu0 0.0
    %606 = vmatpush1.msra.mxu0 %v570
    %607 = vmatprep.subr.mxu0 0.0
    %608 = vmatpush1.msra.mxu0 0.0
    %609 = vmatprep.subr.mxu0 0.0
    %610 = vmatpush1.msra.mxu0 0.0
    %611 = vmatprep.subr.mxu0 0.0
    %612 = vmatpush1.msra.mxu0 0.0
    %613 = vmatprep.subr.mxu0 0.0
    %614 = vmatpush1.msra.mxu0 0.0
    %615 = vmatprep.subr.mxu0 0.0
    %616 = vmatpush1.msra.mxu0 0.0
    %617 = vmatprep.subr.mxu0 0.0
    %618 = vmatpush1.msra.mxu0 0.0
    %619 = vmatprep.subr.mxu0 0.0
    %620 = vmatpush1.msra.mxu0 0.0
    %621 = vmatprep.subr.mxu0 0.0
    %622 = vmatpush1.msra.mxu0 0.0
    %623 = vmatprep.subr.mxu0 0.0
    %624 = vmatpush1.msra.mxu0 0.0
    %625 = vmatprep.subr.mxu0 0.0
    %626 = vmatpush1.msra.mxu0 0.0
    %627 = vmatprep.subr.mxu0 0.0
    %628 = vmatpush1.msra.mxu0 0.0
    %629 = vmatprep.subr.mxu0 0.0
    %630 = vmatpush1.msra.mxu0 0.0
    %631 = vmatprep.subr.mxu0 0.0
    %632 = vmatpush1.msra.mxu0 0.0
    %633 = vmatprep.subr.mxu0 0.0
    %634 = vmatpush1.msra.mxu0 0.0
    %635 = vmatprep.subr.mxu0 0.0
    %636 = vmatpush1.msra.mxu0 0.0
    %637 = vmatprep.subr.mxu0 0.0
    %638 = vmatpush1.msra.mxu0 0.0
    %639 = vmatprep.mubr.f32.mxu0 0.0
    %640 = vmatmul.mubr.f32.gmra.mrb[0].mxu0 %v553
    %v641 = vpop.f32.mrb[0].mxu0
    %v642 = vadd.f32 %v574, %v641
    %v643 = vpop.f32.mrb[0].mxu0
    %644 = vdwg.mxu0
    %645 = vmax.xlane.f32.xlu0 %v642
    %v646 = vpop.xlane.xlu0 %645
    %v647 = vsub.f32 %v642, %v646
    %v648 = vmul.f32 %v647, 1.442695
    %v649 = vpow.pop %v648
    %650 = vadd.xlane.f32.xlu0 %v649
    %v651 = vpop.xlane.xlu0 %650
    %v652 = vrcp.pop %v651
    %v653 = vmul.f32 %v649, %v652
    %654 = vst [vmem:[#allocation11] sm:$0xff] %v653
    // Predicated region
    $region46: #{tpu_custom_call.1} parent=1 // pred_check
      _
    $region47: #{tpu_custom_call.1} parent=1 // pred_check_branch
      %656 = sbr.rel (0) target = $region49
    $region48: #{tpu_custom_call.1} parent=1 // pred_region
      %s658 = ssub.s32 128, 128
      %659 = vsyncadd [#allocation4], %s658
      %s661 = sshll.u32 [#allocation11], 4
      %s662 = int_to_ptr.vmem [resolvable:$true] %s661
      %664 = dma.vmem_to_hbm [thread:$0]  %s662, 128, %s6, [#allocation4]
    $region49: #{tpu_custom_call.1} parent=1 // pred_fallthru
      _
    // Predicated region
    $region50: #{tpu_custom_call.1} parent=1 // pred_check
      _
    $region51: #{tpu_custom_call.1} parent=1 // pred_check_branch
      %666 = sbr.rel (0) target = $region53
    $region52: #{tpu_custom_call.1} parent=1 // pred_region
      %667 = dma.done [#allocation4], 128
    $region53: #{tpu_custom_call.1} parent=1 // pred_fallthru
      _
    %668 = vsyncpa [#allocation3], 1
    %669 = vsyncpa [#allocation6], 1
    %670 = vsyncpa [#allocation9], 1
    %671 = vsyncpa [#allocation4], 1

</llo_original>
